<compile_context>
chip_gen: v5e
topology: v5e:2x2
jax: 0.10.0
libtpu: 0.0.40
codegen_flags: <defaults>
</compile_context>

<pallas_src>
import functools
import math

import jax
import jax.numpy as jnp
from jax import lax
from jax.experimental import pallas as pl
from jax.experimental.pallas import tpu as pltpu

LANES = 128
SUBLANES = 8
MAX_BLOCK_ROWS = 4096   # 4096 x 128 x 4B = 2 MiB per input tile

# sin^2((pi/2) * t) = sum_{k=1..9} C_k * (t^2)^k  for t in [-1, 1]
# (Taylor series of (1 - cos(pi*t))/2 in u = t^2; truncation error < 2e-9 on [-1,1].)
_SIN2_COEFFS = tuple(
    ((-1.0) ** (k + 1)) * math.pi ** (2 * k) / (2.0 * math.factorial(2 * k))
    for k in range(1, 10)
)


def _sin2_half_pi(t):
    """sin(pi/2 * t)**2 as an even polynomial in t, valid for t in [-1, 1]."""
    u = t * t
    p = jnp.float32(_SIN2_COEFFS[-1])
    for coef in _SIN2_COEFFS[-2::-1]:
        p = jnp.float32(coef) + u * p
    return u * p


def _manhattan_kernel(x_ref, y_ref, o_ref, *, block_rows, blocks_per_core,
                      n_blocks, unroll):
    c = pl.program_id(0)   # core axis ("parallel")
    j = pl.program_id(1)   # row-block reduction axis ("arbitrary")
    b_raw = c * blocks_per_core + j

    @pl.when(j == 0)
    def _():
        o_ref[...] = jnp.zeros_like(o_ref)

    # Scalar guard: skip the (clamped) duplicate block entirely when the block count
    # does not divide evenly across cores. Padded zero rows need no mask (they add 0).
    @pl.when(b_raw < n_blocks)
    def _():
        n_groups = block_rows // SUBLANES

        def bins(v):
            t = jnp.tanh(v)
            s2 = _sin2_half_pi(t)              # == x_cos == 1 - cos(pi/2 t)^2
            a0 = jnp.where(t <= 0.0, s2, 0.0)  # x_cos contribution to bin 0
            return a0, s2

        def body(g, carry):
            a0x_acc, sx_acc, a0y_acc, sy_acc = carry
            r = pl.multiple_of(g * SUBLANES, SUBLANES)
            a0x, s2x = bins(x_ref[pl.ds(r, SUBLANES), :])
            a0y, s2y = bins(y_ref[pl.ds(r, SUBLANES), :])
            return (a0x_acc + a0x, sx_acc + s2x, a0y_acc + a0y, sy_acc + s2y)

        zero = jnp.zeros((SUBLANES, LANES), jnp.float32)
        a0x_s, sx_s, a0y_s, sy_s = lax.fori_loop(
            0, n_groups, body, (zero, zero, zero, zero), unroll=unroll)

        o_ref[0, :, :] += a0x_s   # x: x_cos where t <= 0
        o_ref[1, :, :] += sx_s    # x: all x_cos
        o_ref[2, :, :] += a0y_s   # y: x_cos where t <= 0
        o_ref[3, :, :] += sy_s    # y: all x_cos


@functools.lru_cache(maxsize=1)
def _num_tensorcores():
    """2 on chips with 2 TensorCores per device (v7x), else 1. Safe fallback: 1."""
    try:
        info = pltpu.get_tpu_info()
        for attr in ("num_tensorcores", "tensorcore_count", "num_cores", "core_count"):
            v = getattr(info, attr, None)
            if v:
                return max(1, min(2, int(v)))
    except Exception:
        pass
    try:
        kind = jax.devices()[0].device_kind.lower()
        if "v7" in kind or "7x" in kind:
            return 2
    except Exception:
        pass
    return 1


def _round_up(v, m):
    return ((v + m - 1) // m) * m


def manhattan(x, y, *, batch_size, n_bin=8):
    """Pallas implementation of Manhattan.forward(x, y).

    n_bin is accepted for interface parity with the PyTorch module; the SinCos
    histogram never uses the bin centers, so it does not affect the result.
    """
    del n_bin
    x = jnp.asarray(x, jnp.float32)
    y = jnp.asarray(y, jnp.float32)
    assert x.size == y.size, "x and y must have the same number of elements"
    n = x.size

    n_cores = _num_tensorcores()
    rows_raw = pl.cdiv(n, LANES)
    block_rows = min(MAX_BLOCK_ROWS, _round_up(pl.cdiv(rows_raw, n_cores), SUBLANES))
    block_rows = max(block_rows, SUBLANES)
    n_blocks = pl.cdiv(rows_raw, block_rows)
    blocks_per_core = pl.cdiv(n_blocks, n_cores)

    padded_rows = n_blocks * block_rows
    pad = padded_rows * LANES - n
    xf = x.reshape(-1)
    yf = y.reshape(-1)
    if pad:
        # TODO(synk): unaligned sizes pay one pad copy; padded zeros contribute exactly
        # 0 to both accumulated bins (tanh(0)=0 => sin^2=0), so the result is exact.
        xf = jnp.pad(xf, (0, pad))
        yf = jnp.pad(yf, (0, pad))
    x2d = xf.reshape(padded_rows, LANES)
    y2d = yf.reshape(padded_rows, LANES)

    unroll = max(1, min(8, block_rows // SUBLANES))

    kernel = functools.partial(
        _manhattan_kernel,
        block_rows=block_rows,
        blocks_per_core=blocks_per_core,
        n_blocks=n_blocks,
        unroll=unroll,
    )

    def in_index_map(c, j):
        # Clamp so the duplicated (skipped) block never DMAs out of range.
        return (jnp.minimum(c * blocks_per_core + j, n_blocks - 1), 0)

    partials = pl.pallas_call(
        kernel,
        out_shape=jax.ShapeDtypeStruct((n_cores, 4, SUBLANES, LANES), jnp.float32),
        grid=(n_cores, blocks_per_core),
        in_specs=[
            pl.BlockSpec((block_rows, LANES), in_index_map),
            pl.BlockSpec((block_rows, LANES), in_index_map),
        ],
        out_specs=pl.BlockSpec((None, 4, SUBLANES, LANES), lambda c, j: (c, 0, 0, 0)),
        compiler_params=pltpu.CompilerParams(
            dimension_semantics=("parallel", "arbitrary")),
    )(x2d, y2d)

    # Tiny epilogue on (n_cores, 4, 8, 128) partials: derive the 3-bin histograms.
    sums = jnp.sum(partials, axis=(0, 2, 3))            # (4,)
    sx0, sx_all, sy0, sy_all = sums[0], sums[1], sums[2], sums[3]
    n_f = jnp.float32(n)
    bs = jnp.float32(batch_size)
    x_hist = jnp.stack([sx0, n_f - sx_all, sx_all - sx0]) / bs
    y_hist = jnp.stack([sy0, n_f - sy_all, sy_all - sy0]) / bs
    # PyTorch: sum over dim=0 of a (3, 1) tensor -> shape (1,)
    return jnp.sum(jnp.abs(x_hist - y_hist)).reshape(1)


def _reference(x, y, batch_size):
    """Pure-JAX reference mirroring the PyTorch code (for sanity check)."""
    def hist(v):
        t = jnp.tanh(v)
        x_cos = 1.0 - jnp.cos(0.5 * math.pi * t) ** 2
        x_sin = 1.0 - jnp.sin(0.5 * math.pi * t) ** 2
        h = jnp.stack([
            jnp.sum(x_cos * (t <= 0.0)),
            jnp.sum(x_sin),
            jnp.sum(x_cos * (t > 0.0)),
        ])
        return h[:, None]
    xh = hist(jnp.squeeze(x)) / batch_size
    yh = hist(jnp.squeeze(y)) / batch_size
    return jnp.sum(jnp.abs(xh - yh), axis=0)


if __name__ == "__main__":
    batch_size = 2
    n_bin = 8

    key = jax.random.PRNGKey(0)
    kx, ky = jax.random.split(key)
    # NCHW inputs, as the PyTorch module would receive.
    x = jax.random.normal(kx, (2, 4, 16, 16), dtype=jnp.float32)
    y = jax.random.normal(ky, (2, 4, 16, 16), dtype=jnp.float32)

    out = jax.block_until_ready(manhattan(x, y, batch_size=batch_size, n_bin=n_bin))
    ref = jax.block_until_ready(_reference(x, y, batch_size))

    assert out.shape == (1,), out.shape
    # Kernel uses sin^2+cos^2=1, a bounded-range sin^2 polynomial (err < 2e-9/elem) and
    # tiled f32 accumulation; any difference vs. the reference is pure rounding.
    assert jnp.allclose(out, ref, rtol=1e-4, atol=1e-4), (out, ref)

    print("KERNEL_OK")
</pallas_src>

<mosaic_0001>
module attributes {stable_mosaic.version = 11 : i64} {
  func.func @_manhattan_kernel(%arg0: i32, %arg1: i32, %arg2: memref<16x128xf32, #tpu.memory_space<vmem>>, %arg3: memref<16x128xf32, #tpu.memory_space<vmem>>, %arg4: memref<1x4x8x128xf32, #tpu.memory_space<vmem>>) attributes {dimension_semantics = [#tpu.dimension_semantics<parallel>, #tpu.dimension_semantics<arbitrary>], iteration_bounds = array<i64: 1, 1>, scalar_prefetch = 0 : i64, scratch_operands = 0 : i64, tpu.core_type = #tpu.core_type<tc>, window_params = [{transform_indices = @transform_0, window_bounds = array<i64: 16, 128>}, {transform_indices = @transform_1, window_bounds = array<i64: 16, 128>}, {transform_indices = @transform_2, window_bounds = array<i64: 1, 4, 8, 128>}]} {
    %c1_i32 = arith.constant 1 : i32
    %0 = arith.muli %arg0, %c1_i32 : i32
    %1 = arith.addi %0, %arg1 : i32
    %c0_i32 = arith.constant 0 : i32
    %2 = arith.cmpi eq, %arg1, %c0_i32 : i32
    %3 = arith.extui %2 : i1 to i32
    %c0_i32_0 = arith.constant 0 : i32
    %4 = arith.cmpi ne, %3, %c0_i32_0 : i32
    scf.if %4 {
      %cst = arith.constant 0.000000e+00 : f32
      %8 = vector.broadcast %cst : f32 to vector<4x8x128xf32>
      %c0 = arith.constant 0 : index
      %c0_3 = arith.constant 0 : index
      %c0_4 = arith.constant 0 : index
      %c0_5 = arith.constant 0 : index
      %9 = vector.load %arg4[%c0, %c0_3, %c0_4, %c0_5] : memref<1x4x8x128xf32, #tpu.memory_space<vmem>>, vector<1x4x8x128xf32>
      %10 = vector.shape_cast %9 : vector<1x4x8x128xf32> to vector<4x8x128xf32>
      %11 = vector.shape_cast %8 : vector<4x8x128xf32> to vector<1x4x8x128xf32>
      tpu.vector_store %arg4[%c0, %c0_3, %c0_4, %c0_5], %11 {strides = array<i32>} : memref<1x4x8x128xf32, #tpu.memory_space<vmem>>, vector<1x4x8x128xf32>,
    } else {
    }
    %c1_i32_1 = arith.constant 1 : i32
    %5 = arith.cmpi slt, %1, %c1_i32_1 : i32
    %6 = arith.extui %5 : i1 to i32
    %c0_i32_2 = arith.constant 0 : i32
    %7 = arith.cmpi ne, %6, %c0_i32_2 : i32
    scf.if %7 {
      %cst = arith.constant 0.000000e+00 : f32
      %8 = vector.broadcast %cst : f32 to vector<8x128xf32>
      %c0_i32_3 = arith.constant 0 : i32
      %c8_i32 = arith.constant 8 : i32
      %9 = arith.muli %c0_i32_3, %c8_i32 : i32
      %10 = tpu.assume_multiple %9, 8 : i32
      %11 = arith.index_cast %10 : i32 to index
      %c0 = arith.constant 0 : index
      %12 = vector.load %arg2[%11, %c0] : memref<16x128xf32, #tpu.memory_space<vmem>>, vector<8x128xf32>
      %13 = math.tanh %12 : vector<8x128xf32>
      %14 = arith.mulf %13, %13 : vector<8x128xf32>
      %cst_4 = arith.constant 6.93947654E-8 : f32
      %15 = vector.broadcast %cst_4 : f32 to vector<8x128xf32>
      %16 = arith.mulf %14, %15 : vector<8x128xf32>
      %cst_5 = arith.constant -2.15153477E-6 : f32
      %17 = vector.broadcast %cst_5 : f32 to vector<8x128xf32>
      %18 = arith.addf %17, %16 : vector<8x128xf32>
      %19 = arith.mulf %14, %18 : vector<8x128xf32>
      %cst_6 = arith.constant 5.23190538E-5 : f32
      %20 = vector.broadcast %cst_6 : f32 to vector<8x128xf32>
      %21 = arith.addf %20, %19 : vector<8x128xf32>
      %22 = arith.mulf %14, %21 : vector<8x128xf32>
      %cst_7 = arith.constant -9.64787148E-4 : f32
      %23 = vector.broadcast %cst_7 : f32 to vector<8x128xf32>
      %24 = arith.addf %23, %22 : vector<8x128xf32>
      %25 = arith.mulf %14, %24 : vector<8x128xf32>
      %cst_8 = arith.constant 0.0129034454 : f32
      %26 = vector.broadcast %cst_8 : f32 to vector<8x128xf32>
      %27 = arith.addf %26, %25 : vector<8x128xf32>
      %28 = arith.mulf %14, %27 : vector<8x128xf32>
      %cst_9 = arith.constant -0.117665313 : f32
      %29 = vector.broadcast %cst_9 : f32 to vector<8x128xf32>
      %30 = arith.addf %29, %28 : vector<8x128xf32>
      %31 = arith.mulf %14, %30 : vector<8x128xf32>
      %cst_10 = arith.constant 0.667631388 : f32
      %32 = vector.broadcast %cst_10 : f32 to vector<8x128xf32>
      %33 = arith.addf %32, %31 : vector<8x128xf32>
      %34 = arith.mulf %14, %33 : vector<8x128xf32>
      %cst_11 = arith.constant -2.029356 : f32
      %35 = vector.broadcast %cst_11 : f32 to vector<8x128xf32>
      %36 = arith.addf %35, %34 : vector<8x128xf32>
      %37 = arith.mulf %14, %36 : vector<8x128xf32>
      %cst_12 = arith.constant 2.46740103 : f32
      %38 = vector.broadcast %cst_12 : f32 to vector<8x128xf32>
      %39 = arith.addf %38, %37 : vector<8x128xf32>
      %40 = arith.mulf %14, %39 : vector<8x128xf32>
      %cst_13 = arith.constant 0.000000e+00 : f32
      %41 = vector.broadcast %cst_13 : f32 to vector<8x128xf32>
      %42 = arith.cmpf ole, %13, %41 : vector<8x128xf32>
      %cst_14 = arith.constant 0.000000e+00 : f32
      %43 = vector.broadcast %cst_14 : f32 to vector<8x128xf32>
      %44 = arith.select %42, %40, %43 : vector<8x128xi1>, vector<8x128xf32>
      %45 = arith.index_cast %10 : i32 to index
      %c0_15 = arith.constant 0 : index
      %46 = vector.load %arg3[%45, %c0_15] : memref<16x128xf32, #tpu.memory_space<vmem>>, vector<8x128xf32>
      %47 = math.tanh %46 : vector<8x128xf32>
      %48 = arith.mulf %47, %47 : vector<8x128xf32>
      %cst_16 = arith.constant 6.93947654E-8 : f32
      %49 = vector.broadcast %cst_16 : f32 to vector<8x128xf32>
      %50 = arith.mulf %48, %49 : vector<8x128xf32>
      %cst_17 = arith.constant -2.15153477E-6 : f32
      %51 = vector.broadcast %cst_17 : f32 to vector<8x128xf32>
      %52 = arith.addf %51, %50 : vector<8x128xf32>
      %53 = arith.mulf %48, %52 : vector<8x128xf32>
      %cst_18 = arith.constant 5.23190538E-5 : f32
      %54 = vector.broadcast %cst_18 : f32 to vector<8x128xf32>
      %55 = arith.addf %54, %53 : vector<8x128xf32>
      %56 = arith.mulf %48, %55 : vector<8x128xf32>
      %cst_19 = arith.constant -9.64787148E-4 : f32
      %57 = vector.broadcast %cst_19 : f32 to vector<8x128xf32>
      %58 = arith.addf %57, %56 : vector<8x128xf32>
      %59 = arith.mulf %48, %58 : vector<8x128xf32>
      %cst_20 = arith.constant 0.0129034454 : f32
      %60 = vector.broadcast %cst_20 : f32 to vector<8x128xf32>
      %61 = arith.addf %60, %59 : vector<8x128xf32>
      %62 = arith.mulf %48, %61 : vector<8x128xf32>
      %cst_21 = arith.constant -0.117665313 : f32
      %63 = vector.broadcast %cst_21 : f32 to vector<8x128xf32>
      %64 = arith.addf %63, %62 : vector<8x128xf32>
      %65 = arith.mulf %48, %64 : vector<8x128xf32>
      %cst_22 = arith.constant 0.667631388 : f32
      %66 = vector.broadcast %cst_22 : f32 to vector<8x128xf32>
      %67 = arith.addf %66, %65 : vector<8x128xf32>
      %68 = arith.mulf %48, %67 : vector<8x128xf32>
      %cst_23 = arith.constant -2.029356 : f32
      %69 = vector.broadcast %cst_23 : f32 to vector<8x128xf32>
      %70 = arith.addf %69, %68 : vector<8x128xf32>
      %71 = arith.mulf %48, %70 : vector<8x128xf32>
      %cst_24 = arith.constant 2.46740103 : f32
      %72 = vector.broadcast %cst_24 : f32 to vector<8x128xf32>
      %73 = arith.addf %72, %71 : vector<8x128xf32>
      %74 = arith.mulf %48, %73 : vector<8x128xf32>
      %cst_25 = arith.constant 0.000000e+00 : f32
      %75 = vector.broadcast %cst_25 : f32 to vector<8x128xf32>
      %76 = arith.cmpf ole, %47, %75 : vector<8x128xf32>
      %cst_26 = arith.constant 0.000000e+00 : f32
      %77 = vector.broadcast %cst_26 : f32 to vector<8x128xf32>
      %78 = arith.select %76, %74, %77 : vector<8x128xi1>, vector<8x128xf32>
      %79 = arith.addf %8, %44 : vector<8x128xf32>
      %80 = arith.addf %8, %40 : vector<8x128xf32>
      %81 = arith.addf %8, %78 : vector<8x128xf32>
      %82 = arith.addf %8, %74 : vector<8x128xf32>
      %c1_i32_27 = arith.constant 1 : i32
      %c8_i32_28 = arith.constant 8 : i32
      %83 = arith.muli %c1_i32_27, %c8_i32_28 : i32
      %84 = tpu.assume_multiple %83, 8 : i32
      %85 = arith.index_cast %84 : i32 to index
      %c0_29 = arith.constant 0 : index
      %86 = vector.load %arg2[%85, %c0_29] : memref<16x128xf32, #tpu.memory_space<vmem>>, vector<8x128xf32>
      %87 = math.tanh %86 : vector<8x128xf32>
      %88 = arith.mulf %87, %87 : vector<8x128xf32>
      %cst_30 = arith.constant 6.93947654E-8 : f32
      %89 = vector.broadcast %cst_30 : f32 to vector<8x128xf32>
      %90 = arith.mulf %88, %89 : vector<8x128xf32>
      %cst_31 = arith.constant -2.15153477E-6 : f32
      %91 = vector.broadcast %cst_31 : f32 to vector<8x128xf32>
      %92 = arith.addf %91, %90 : vector<8x128xf32>
      %93 = arith.mulf %88, %92 : vector<8x128xf32>
      %cst_32 = arith.constant 5.23190538E-5 : f32
      %94 = vector.broadcast %cst_32 : f32 to vector<8x128xf32>
      %95 = arith.addf %94, %93 : vector<8x128xf32>
      %96 = arith.mulf %88, %95 : vector<8x128xf32>
      %cst_33 = arith.constant -9.64787148E-4 : f32
      %97 = vector.broadcast %cst_33 : f32 to vector<8x128xf32>
      %98 = arith.addf %97, %96 : vector<8x128xf32>
      %99 = arith.mulf %88, %98 : vector<8x128xf32>
      %cst_34 = arith.constant 0.0129034454 : f32
      %100 = vector.broadcast %cst_34 : f32 to vector<8x128xf32>
      %101 = arith.addf %100, %99 : vector<8x128xf32>
      %102 = arith.mulf %88, %101 : vector<8x128xf32>
      %cst_35 = arith.constant -0.117665313 : f32
      %103 = vector.broadcast %cst_35 : f32 to vector<8x128xf32>
      %104 = arith.addf %103, %102 : vector<8x128xf32>
      %105 = arith.mulf %88, %104 : vector<8x128xf32>
      %cst_36 = arith.constant 0.667631388 : f32
      %106 = vector.broadcast %cst_36 : f32 to vector<8x128xf32>
      %107 = arith.addf %106, %105 : vector<8x128xf32>
      %108 = arith.mulf %88, %107 : vector<8x128xf32>
      %cst_37 = arith.constant -2.029356 : f32
      %109 = vector.broadcast %cst_37 : f32 to vector<8x128xf32>
      %110 = arith.addf %109, %108 : vector<8x128xf32>
      %111 = arith.mulf %88, %110 : vector<8x128xf32>
      %cst_38 = arith.constant 2.46740103 : f32
      %112 = vector.broadcast %cst_38 : f32 to vector<8x128xf32>
      %113 = arith.addf %112, %111 : vector<8x128xf32>
      %114 = arith.mulf %88, %113 : vector<8x128xf32>
      %cst_39 = arith.constant 0.000000e+00 : f32
      %115 = vector.broadcast %cst_39 : f32 to vector<8x128xf32>
      %116 = arith.cmpf ole, %87, %115 : vector<8x128xf32>
      %cst_40 = arith.constant 0.000000e+00 : f32
      %117 = vector.broadcast %cst_40 : f32 to vector<8x128xf32>
      %118 = arith.select %116, %114, %117 : vector<8x128xi1>, vector<8x128xf32>
      %119 = arith.index_cast %84 : i32 to index
      %c0_41 = arith.constant 0 : index
      %120 = vector.load %arg3[%119, %c0_41] : memref<16x128xf32, #tpu.memory_space<vmem>>, vector<8x128xf32>
      %121 = math.tanh %120 : vector<8x128xf32>
      %122 = arith.mulf %121, %121 : vector<8x128xf32>
      %cst_42 = arith.constant 6.93947654E-8 : f32
      %123 = vector.broadcast %cst_42 : f32 to vector<8x128xf32>
      %124 = arith.mulf %122, %123 : vector<8x128xf32>
      %cst_43 = arith.constant -2.15153477E-6 : f32
      %125 = vector.broadcast %cst_43 : f32 to vector<8x128xf32>
      %126 = arith.addf %125, %124 : vector<8x128xf32>
      %127 = arith.mulf %122, %126 : vector<8x128xf32>
      %cst_44 = arith.constant 5.23190538E-5 : f32
      %128 = vector.broadcast %cst_44 : f32 to vector<8x128xf32>
      %129 = arith.addf %128, %127 : vector<8x128xf32>
      %130 = arith.mulf %122, %129 : vector<8x128xf32>
      %cst_45 = arith.constant -9.64787148E-4 : f32
      %131 = vector.broadcast %cst_45 : f32 to vector<8x128xf32>
      %132 = arith.addf %131, %130 : vector<8x128xf32>
      %133 = arith.mulf %122, %132 : vector<8x128xf32>
      %cst_46 = arith.constant 0.0129034454 : f32
      %134 = vector.broadcast %cst_46 : f32 to vector<8x128xf32>
      %135 = arith.addf %134, %133 : vector<8x128xf32>
      %136 = arith.mulf %122, %135 : vector<8x128xf32>
      %cst_47 = arith.constant -0.117665313 : f32
      %137 = vector.broadcast %cst_47 : f32 to vector<8x128xf32>
      %138 = arith.addf %137, %136 : vector<8x128xf32>
      %139 = arith.mulf %122, %138 : vector<8x128xf32>
      %cst_48 = arith.constant 0.667631388 : f32
      %140 = vector.broadcast %cst_48 : f32 to vector<8x128xf32>
      %141 = arith.addf %140, %139 : vector<8x128xf32>
      %142 = arith.mulf %122, %141 : vector<8x128xf32>
      %cst_49 = arith.constant -2.029356 : f32
      %143 = vector.broadcast %cst_49 : f32 to vector<8x128xf32>
      %144 = arith.addf %143, %142 : vector<8x128xf32>
      %145 = arith.mulf %122, %144 : vector<8x128xf32>
      %cst_50 = arith.constant 2.46740103 : f32
      %146 = vector.broadcast %cst_50 : f32 to vector<8x128xf32>
      %147 = arith.addf %146, %145 : vector<8x128xf32>
      %148 = arith.mulf %122, %147 : vector<8x128xf32>
      %cst_51 = arith.constant 0.000000e+00 : f32
      %149 = vector.broadcast %cst_51 : f32 to vector<8x128xf32>
      %150 = arith.cmpf ole, %121, %149 : vector<8x128xf32>
      %cst_52 = arith.constant 0.000000e+00 : f32
      %151 = vector.broadcast %cst_52 : f32 to vector<8x128xf32>
      %152 = arith.select %150, %148, %151 : vector<8x128xi1>, vector<8x128xf32>
      %153 = arith.addf %79, %118 : vector<8x128xf32>
      %154 = arith.addf %80, %114 : vector<8x128xf32>
      %155 = arith.addf %81, %152 : vector<8x128xf32>
      %156 = arith.addf %82, %148 : vector<8x128xf32>
      %c2_i32 = arith.constant 2 : i32
      %c0_53 = arith.constant 0 : index
      %c0_54 = arith.constant 0 : index
      %c0_55 = arith.constant 0 : index
      %c0_56 = arith.constant 0 : index
      %157 = vector.load %arg4[%c0_53, %c0_54, %c0_55, %c0_56] : memref<1x4x8x128xf32, #tpu.memory_space<vmem>>, vector<1x1x8x128xf32>
      %158 = vector.shape_cast %157 : vector<1x1x8x128xf32> to vector<8x128xf32>
      %159 = arith.addf %158, %153 : vector<8x128xf32>
      %c0_57 = arith.constant 0 : index
      %c0_58 = arith.constant 0 : index
      %c0_59 = arith.constant 0 : index
      %c0_60 = arith.constant 0 : index
      %160 = vector.load %arg4[%c0_57, %c0_58, %c0_59, %c0_60] : memref<1x4x8x128xf32, #tpu.memory_space<vmem>>, vector<1x1x8x128xf32>
      %161 = vector.shape_cast %160 : vector<1x1x8x128xf32> to vector<8x128xf32>
      %162 = vector.shape_cast %159 : vector<8x128xf32> to vector<1x1x8x128xf32>
      tpu.vector_store %arg4[%c0_57, %c0_58, %c0_59, %c0_60], %162 {strides = array<i32>} : memref<1x4x8x128xf32, #tpu.memory_space<vmem>>, vector<1x1x8x128xf32>,
      %c0_61 = arith.constant 0 : index
      %c1 = arith.constant 1 : index
      %c0_62 = arith.constant 0 : index
      %c0_63 = arith.constant 0 : index
      %163 = vector.load %arg4[%c0_61, %c1, %c0_62, %c0_63] : memref<1x4x8x128xf32, #tpu.memory_space<vmem>>, vector<1x1x8x128xf32>
      %164 = vector.shape_cast %163 : vector<1x1x8x128xf32> to vector<8x128xf32>
      %165 = arith.addf %164, %154 : vector<8x128xf32>
      %c0_64 = arith.constant 0 : index
      %c1_65 = arith.constant 1 : index
      %c0_66 = arith.constant 0 : index
      %c0_67 = arith.constant 0 : index
      %166 = vector.load %arg4[%c0_64, %c1_65, %c0_66, %c0_67] : memref<1x4x8x128xf32, #tpu.memory_space<vmem>>, vector<1x1x8x128xf32>
      %167 = vector.shape_cast %166 : vector<1x1x8x128xf32> to vector<8x128xf32>
      %168 = vector.shape_cast %165 : vector<8x128xf32> to vector<1x1x8x128xf32>
      tpu.vector_store %arg4[%c0_64, %c1_65, %c0_66, %c0_67], %168 {strides = array<i32>} : memref<1x4x8x128xf32, #tpu.memory_space<vmem>>, vector<1x1x8x128xf32>,
      %c0_68 = arith.constant 0 : index
      %c2 = arith.constant 2 : index
      %c0_69 = arith.constant 0 : index
      %c0_70 = arith.constant 0 : index
      %169 = vector.load %arg4[%c0_68, %c2, %c0_69, %c0_70] : memref<1x4x8x128xf32, #tpu.memory_space<vmem>>, vector<1x1x8x128xf32>
      %170 = vector.shape_cast %169 : vector<1x1x8x128xf32> to vector<8x128xf32>
      %171 = arith.addf %170, %155 : vector<8x128xf32>
      %c0_71 = arith.constant 0 : index
      %c2_72 = arith.constant 2 : index
      %c0_73 = arith.constant 0 : index
      %c0_74 = arith.constant 0 : index
      %172 = vector.load %arg4[%c0_71, %c2_72, %c0_73, %c0_74] : memref<1x4x8x128xf32, #tpu.memory_space<vmem>>, vector<1x1x8x128xf32>
      %173 = vector.shape_cast %172 : vector<1x1x8x128xf32> to vector<8x128xf32>
      %174 = vector.shape_cast %171 : vector<8x128xf32> to vector<1x1x8x128xf32>
      tpu.vector_store %arg4[%c0_71, %c2_72, %c0_73, %c0_74], %174 {strides = array<i32>} : memref<1x4x8x128xf32, #tpu.memory_space<vmem>>, vector<1x1x8x128xf32>,
      %c0_75 = arith.constant 0 : index
      %c3 = arith.constant 3 : index
      %c0_76 = arith.constant 0 : index
      %c0_77 = arith.constant 0 : index
      %175 = vector.load %arg4[%c0_75, %c3, %c0_76, %c0_77] : memref<1x4x8x128xf32, #tpu.memory_space<vmem>>, vector<1x1x8x128xf32>
      %176 = vector.shape_cast %175 : vector<1x1x8x128xf32> to vector<8x128xf32>
      %177 = arith.addf %176, %156 : vector<8x128xf32>
      %c0_78 = arith.constant 0 : index
      %c3_79 = arith.constant 3 : index
      %c0_80 = arith.constant 0 : index
      %c0_81 = arith.constant 0 : index
      %178 = vector.load %arg4[%c0_78, %c3_79, %c0_80, %c0_81] : memref<1x4x8x128xf32, #tpu.memory_space<vmem>>, vector<1x1x8x128xf32>
      %179 = vector.shape_cast %178 : vector<1x1x8x128xf32> to vector<8x128xf32>
      %180 = vector.shape_cast %177 : vector<8x128xf32> to vector<1x1x8x128xf32>
      tpu.vector_store %arg4[%c0_78, %c3_79, %c0_80, %c0_81], %180 {strides = array<i32>} : memref<1x4x8x128xf32, #tpu.memory_space<vmem>>, vector<1x1x8x128xf32>,
    } else {
    }
    return
  }
  func.func @transform_0(%arg0: i32, %arg1: i32) -> (i32, i32) {
    %c1_i32 = arith.constant 1 : i32
    %0 = arith.muli %arg0, %c1_i32 : i32
    %1 = arith.addi %0, %arg1 : i32
    %c0_i32 = arith.constant 0 : i32
    %2 = arith.minsi %1, %c0_i32 : i32
    %c0_i32_0 = arith.constant 0 : i32
    %c0_i32_1 = arith.constant 0 : i32
    return %2, %c0_i32_0 : i32, i32
  }
  func.func @transform_1(%arg0: i32, %arg1: i32) -> (i32, i32) {
    %c1_i32 = arith.constant 1 : i32
    %0 = arith.muli %arg0, %c1_i32 : i32
    %1 = arith.addi %0, %arg1 : i32
    %c0_i32 = arith.constant 0 : i32
    %2 = arith.minsi %1, %c0_i32 : i32
    %c0_i32_0 = arith.constant 0 : i32
    %c0_i32_1 = arith.constant 0 : i32
    return %2, %c0_i32_0 : i32, i32
  }
  func.func @transform_2(%arg0: i32, %arg1: i32) -> (i32, i32, i32, i32) {
    %c0_i32 = arith.constant 0 : i32
    %c0_i32_0 = arith.constant 0 : i32
    %c0_i32_1 = arith.constant 0 : i32
    %c0_i32_2 = arith.constant 0 : i32
    return %arg0, %c0_i32, %c0_i32_0, %c0_i32_1 : i32, i32, i32, i32
  }
}

</mosaic_0001>

<llo_original>
// kernel: tpu_custom_call.1
$region0: #{tpu_custom_call.1}
  #allocation0 [shape = 'u32[]', space=smem, size = 0x4, offset = 0x4, fixed_abs, tag = 'smem constant byte address 0x4 - core index']
  #allocation1 [shape = 'u32[72,128]{1,0:T(1,128)}', space=vmem, size = 0x9000, scoped, tag = 'internal scratch']
  %s0 = inlined_call_operand.hbm [shape: f32[16,128], index: 0, kind: input, shape index: {}]
  %s1 = inlined_call_operand.hbm [shape: f32[16,128], index: 1, kind: input, shape index: {}]
  %s2 = inlined_call_operand.hbm [shape: f32[1,4,8,128], index: 2, kind: output, shape index: {}]
  %s3 = sld [smem:[#allocation0]]
  $region34: #{tpu_custom_call.1} parent=0
    _
  %s5 = ssub.s32 1, %s3
  %s6 = scalar_select 0, %s5, %s3
  $region1: #{tpu_custom_call.1} parent=0
    #allocation2 [shape = 'u8[8192]{0}', space=vmem, size = 0x2000, scoped, tag = 'input window, operand 0, single buffered']
    #allocation3 [shape = 's32[1]{0}', space=sflag, size = 0x4, scoped, tag = 'scoped memory for tpu_custom_call.1']
    #allocation4 [shape = 's32[1]{0}', space=sflag, size = 0x4, scoped, tag = 'scoped memory for tpu_custom_call.1']
    #allocation5 [shape = 'u8[8192]{0}', space=vmem, size = 0x2000, scoped, tag = 'input window, operand 1, single buffered']
    #allocation6 [shape = 's32[1]{0}', space=sflag, size = 0x4, scoped, tag = 'scoped memory for tpu_custom_call.1']
    #allocation7 [shape = 'u8[16384]{0}', space=vmem, size = 0x4000, scoped, tag = 'output window, operand 0, single buffered']
    %7 = vsyncpa [#allocation3], 0
    %8 = vsyncpa [#allocation6], 0
    %9 = vsyncpa [#allocation4], 0
    // Predicated region
    $region2: #{tpu_custom_call.1} parent=1 // pred_check
      _
    $region3: #{tpu_custom_call.1} parent=1 // pred_check_branch
      %11 = sbr.rel (0) target = $region5
    $region4: #{tpu_custom_call.1} parent=1 // pred_region
      %s12 = sadd.s32 0, 0
      %p13 = scmp.lt.s32.totalorder %s12, 0
      %s14 = scalar_select %p13, %s12, 0
      %s15 = smul.u32 2, %s14
      %17 = vsyncadd [#allocation3], 0
      %s18 = smul.addr %s15, 8
      %s19 = scalar_lea.hbm %s0, %s18
      %s20 = sshll.u32 %s19, 4
      %s21 = int_to_ptr.hbm [resolvable:$true] %s20
      %s22 = sshll.u32 [#allocation2], 4
      %s23 = int_to_ptr.vmem [resolvable:$true] %s22
      %28 = dma.hbm_to_vmem [thread:$0]  %s21, 256, %s23, [#allocation3], 128, 128, 8
    $region5: #{tpu_custom_call.1} parent=1 // pred_fallthru
      _
    // Predicated region
    $region6: #{tpu_custom_call.1} parent=1 // pred_check
      _
    $region7: #{tpu_custom_call.1} parent=1 // pred_check_branch
      %30 = sbr.rel (0) target = $region9
    $region8: #{tpu_custom_call.1} parent=1 // pred_region
      %s31 = sadd.s32 0, 0
      %p32 = scmp.lt.s32.totalorder %s31, 0
      %s33 = scalar_select %p32, %s31, 0
      %s34 = smul.u32 2, %s33
      %36 = vsyncadd [#allocation6], 0
      %s37 = smul.addr %s34, 8
      %s38 = scalar_lea.hbm %s1, %s37
      %s39 = sshll.u32 %s38, 4
      %s40 = int_to_ptr.hbm [resolvable:$true] %s39
      %s41 = sshll.u32 [#allocation5], 4
      %s42 = int_to_ptr.vmem [resolvable:$true] %s41
      %47 = dma.hbm_to_vmem [thread:$0]  %s40, 256, %s42, [#allocation6], 128, 128, 8
    $region9: #{tpu_custom_call.1} parent=1 // pred_fallthru
      _
    // Predicated region
    $region10: #{tpu_custom_call.1} parent=1 // pred_check
      _
    $region11: #{tpu_custom_call.1} parent=1 // pred_check_branch
      %49 = sbr.rel (0) target = $region13
    $region12: #{tpu_custom_call.1} parent=1 // pred_region
      %51 = dma.done [#allocation3], 256
    $region13: #{tpu_custom_call.1} parent=1 // pred_fallthru
      _
    // Predicated region
    $region14: #{tpu_custom_call.1} parent=1 // pred_check
      _
    $region15: #{tpu_custom_call.1} parent=1 // pred_check_branch
      %53 = sbr.rel (0) target = $region17
    $region16: #{tpu_custom_call.1} parent=1 // pred_region
      %55 = dma.done [#allocation6], 256
    $region17: #{tpu_custom_call.1} parent=1 // pred_fallthru
      _
    %s56 = sadd.s32 0, 0
    %p57 = scmp.lt.s32.totalorder %s56, 0
    %s58 = scalar_select %p57, %s56, 0
    %s59 = smul.u32 2, %s58
    %s60 = sadd.s32 0, 0
    %p61 = scmp.lt.s32.totalorder %s60, 0
    %s62 = scalar_select %p61, %s60, 0
    %s63 = smul.u32 2, %s62
    %s64 = sadd.s32 0, 0
    %p65 = scmp.eq.s32.totalorder 0, 0
    // Predicated region
    $region18: #{tpu_custom_call.1} parent=1 // pred_check
      %p66 = pneg %p65
    $region19: #{tpu_custom_call.1} parent=1 // pred_check_branch
      %68 = sbr.rel (%p66) target = $region21
    $region20: #{tpu_custom_call.1} parent=1 // pred_region
      %69 = vst [vmem:[#allocation7] sm:$0xff] 0.0
      %70 = vst [vmem:[#allocation7 + $0x8] sm:$0xff] 0.0
      %71 = vst [vmem:[#allocation7 + $0x10] sm:$0xff] 0.0
      %72 = vst [vmem:[#allocation7 + $0x18] sm:$0xff] 0.0
    $region21: #{tpu_custom_call.1} parent=1 // pred_fallthru
      _
    %p73 = scmp.lt.s32.totalorder %s64, 1
    // Predicated region
    $region22: #{tpu_custom_call.1} parent=1 // pred_check
      %p74 = pneg %p73
    $region23: #{tpu_custom_call.1} parent=1 // pred_check_branch
      %76 = sbr.rel (%p74) target = $region25
    $region24: #{tpu_custom_call.1} parent=1 // pred_region
      %v77 = vld [vmem:[#allocation2] sm:$0xff]
      %v78 = vtanh.pop %v77
      %v79 = vmul.f32 %v78, %v78
      %v80 = vmul.f32 %v79, 6.9394765e-08
      %v81 = vadd.f32 %v80, -2.1515348e-06
      %v82 = vmul.f32 %v79, %v81
      %v83 = vadd.f32 %v82, 5.2319054e-05
      %v84 = vmul.f32 %v79, %v83
      %v85 = vadd.f32 %v84, -0.00096478715
      %v86 = vmul.f32 %v79, %v85
      %v87 = vadd.f32 %v86, 0.012903445
      %v88 = vmul.f32 %v79, %v87
      %v89 = vadd.f32 %v88, -0.11766531
      %v90 = vmul.f32 %v79, %v89
      %v91 = vadd.f32 %v90, 0.6676314
      %v92 = vmul.f32 %v79, %v91
      %v93 = vadd.f32 %v92, -2.029356
      %v94 = vmul.f32 %v79, %v93
      %v95 = vadd.f32 %v94, 2.467401
      %v96 = vmul.f32 %v79, %v95
      %vm97 = vcmp.le.f32.partialorder %v78, 0.0
      %v98 = vsel %vm97, %v96, 0.0
      %v99 = vld [vmem:[#allocation5] sm:$0xff]
      %v100 = vtanh.pop %v99
      %v101 = vmul.f32 %v100, %v100
      %v102 = vmul.f32 %v101, 6.9394765e-08
      %v103 = vadd.f32 %v102, -2.1515348e-06
      %v104 = vmul.f32 %v101, %v103
      %v105 = vadd.f32 %v104, 5.2319054e-05
      %v106 = vmul.f32 %v101, %v105
      %v107 = vadd.f32 %v106, -0.00096478715
      %v108 = vmul.f32 %v101, %v107
      %v109 = vadd.f32 %v108, 0.012903445
      %v110 = vmul.f32 %v101, %v109
      %v111 = vadd.f32 %v110, -0.11766531
      %v112 = vmul.f32 %v101, %v111
      %v113 = vadd.f32 %v112, 0.6676314
      %v114 = vmul.f32 %v101, %v113
      %v115 = vadd.f32 %v114, -2.029356
      %v116 = vmul.f32 %v101, %v115
      %v117 = vadd.f32 %v116, 2.467401
      %v118 = vmul.f32 %v101, %v117
      %vm119 = vcmp.le.f32.partialorder %v100, 0.0
      %v120 = vsel %vm119, %v118, 0.0
      %v121 = vadd.f32 %v98, 0.0
      %v122 = vadd.f32 %v96, 0.0
      %v123 = vadd.f32 %v120, 0.0
      %v124 = vadd.f32 %v118, 0.0
      %s125 = scalar_lea.vmem [#allocation2], 8
      %v126 = vld [vmem:[%s125] sm:$0xff]
      %v127 = vtanh.pop %v126
      %v128 = vmul.f32 %v127, %v127
      %v129 = vmul.f32 %v128, 6.9394765e-08
      %v130 = vadd.f32 %v129, -2.1515348e-06
      %v131 = vmul.f32 %v128, %v130
      %v132 = vadd.f32 %v131, 5.2319054e-05
      %v133 = vmul.f32 %v128, %v132
      %v134 = vadd.f32 %v133, -0.00096478715
      %v135 = vmul.f32 %v128, %v134
      %v136 = vadd.f32 %v135, 0.012903445
      %v137 = vmul.f32 %v128, %v136
      %v138 = vadd.f32 %v137, -0.11766531
      %v139 = vmul.f32 %v128, %v138
      %v140 = vadd.f32 %v139, 0.6676314
      %v141 = vmul.f32 %v128, %v140
      %v142 = vadd.f32 %v141, -2.029356
      %v143 = vmul.f32 %v128, %v142
      %v144 = vadd.f32 %v143, 2.467401
      %v145 = vmul.f32 %v128, %v144
      %vm146 = vcmp.le.f32.partialorder %v127, 0.0
      %v147 = vsel %vm146, %v145, 0.0
      %s148 = scalar_lea.vmem [#allocation5], 8
      %v149 = vld [vmem:[%s148] sm:$0xff]
      %v150 = vtanh.pop %v149
      %v151 = vmul.f32 %v150, %v150
      %v152 = vmul.f32 %v151, 6.9394765e-08
      %v153 = vadd.f32 %v152, -2.1515348e-06
      %v154 = vmul.f32 %v151, %v153
      %v155 = vadd.f32 %v154, 5.2319054e-05
      %v156 = vmul.f32 %v151, %v155
      %v157 = vadd.f32 %v156, -0.00096478715
      %v158 = vmul.f32 %v151, %v157
      %v159 = vadd.f32 %v158, 0.012903445
      %v160 = vmul.f32 %v151, %v159
      %v161 = vadd.f32 %v160, -0.11766531
      %v162 = vmul.f32 %v151, %v161
      %v163 = vadd.f32 %v162, 0.6676314
      %v164 = vmul.f32 %v151, %v163
      %v165 = vadd.f32 %v164, -2.029356
      %v166 = vmul.f32 %v151, %v165
      %v167 = vadd.f32 %v166, 2.467401
      %v168 = vmul.f32 %v151, %v167
      %vm169 = vcmp.le.f32.partialorder %v150, 0.0
      %v170 = vsel %vm169, %v168, 0.0
      %v171 = vadd.f32 %v121, %v147
      %v172 = vadd.f32 %v122, %v145
      %v173 = vadd.f32 %v123, %v170
      %v174 = vadd.f32 %v124, %v168
      %v175 = vld [vmem:[#allocation7] sm:$0xff]
      %v176 = vadd.f32 %v175, %v171
      %177 = vst [vmem:[#allocation7] sm:$0xff] %v176
      %s178 = scalar_lea.vmem [#allocation7], 8
      %v179 = vld [vmem:[%s178] sm:$0xff]
      %v180 = vadd.f32 %v179, %v172
      %181 = vst [vmem:[%s178] sm:$0xff] %v180
      %s182 = scalar_lea.vmem [#allocation7], 16
      %v183 = vld [vmem:[%s182] sm:$0xff]
      %v184 = vadd.f32 %v183, %v173
      %185 = vst [vmem:[%s182] sm:$0xff] %v184
      %s186 = scalar_lea.vmem [#allocation7], 24
      %v187 = vld [vmem:[%s186] sm:$0xff]
      %v188 = vadd.f32 %v187, %v174
      %189 = vst [vmem:[%s186] sm:$0xff] %v188
    $region25: #{tpu_custom_call.1} parent=1 // pred_fallthru
      _
    // Predicated region
    $region26: #{tpu_custom_call.1} parent=1 // pred_check
      _
    $region27: #{tpu_custom_call.1} parent=1 // pred_check_branch
      %191 = sbr.rel (0) target = $region29
    $region28: #{tpu_custom_call.1} parent=1 // pred_region
      %193 = vsyncadd [#allocation4], 0
      %s194 = sshll.u32 [#allocation7], 4
      %s195 = int_to_ptr.vmem [resolvable:$true] %s194
      %s196 = sshll.u32 %s2, 4
      %s197 = int_to_ptr.hbm [resolvable:$true] %s196
      %202 = dma.vmem_to_hbm [thread:$0]  %s195, 512, %s197, [#allocation4], 128, 128, 8
    $region29: #{tpu_custom_call.1} parent=1 // pred_fallthru
      _
    // Predicated region
    $region30: #{tpu_custom_call.1} parent=1 // pred_check
      _
    $region31: #{tpu_custom_call.1} parent=1 // pred_check_branch
      %204 = sbr.rel (0) target = $region33
    $region32: #{tpu_custom_call.1} parent=1 // pred_region
      %206 = dma.done [#allocation4], 512
    $region33: #{tpu_custom_call.1} parent=1 // pred_fallthru
      _
    %207 = vsyncpa [#allocation3], 1
    %208 = vsyncpa [#allocation6], 1
    %209 = vsyncpa [#allocation4], 1

</llo_original>
